<compile_context>
chip_gen: v7x
topology: tpu7x:2x2x1
jax: 0.10.0
libtpu: 0.0.40
codegen_flags: <defaults>
</compile_context>

<pallas_src>
import jax
import jax.numpy as jnp
from jax.experimental import pallas as pl
from jax.experimental.pallas import tpu as pltpu


# --------------------------------------------------------------------------- #
# Kernel
# --------------------------------------------------------------------------- #
def dueling_kernel(
    x_ref,              # [tb, in_dim]      f32 or bf16
    w1_ref, b1_ref,     # [in_dim, Hp] bf16, [1, Hp] f32
    wh_ref, bh_ref,     # [Hp, HHp]    bf16, [1, HHp] f32   (adv|val hidden, fused)
    wq_ref, bq_ref,     # [HHp, out_pad] bf16, [1, out_pad] f32 (dueling combine folded in)
    q_ref,              # [tb, out_dim] f32
):
    # feature = relu(x @ W1 + b1)  — bf16 operands, f32 MXU accumulation.
    x = x_ref[...].astype(jnp.bfloat16)
    feat = jnp.dot(x, w1_ref[...], preferred_element_type=jnp.float32) + b1_ref[...]
    feat = jnp.maximum(feat, 0.0)

    # fused advantage/value hidden layer: one [tb,Hp] @ [Hp,HHp] push.
    h = jnp.dot(feat.astype(jnp.bfloat16), wh_ref[...],
                preferred_element_type=jnp.float32) + bh_ref[...]
    h = jnp.maximum(h, 0.0)

    # fused dueling output: q = val + adv - adv.mean(-1) folded into wq/bq
    # (lane-padded weight for the MXU; only the real out_dim lanes are stored).
    q = jnp.dot(h.astype(jnp.bfloat16), wq_ref[...],
                preferred_element_type=jnp.float32) + bq_ref[...]
    q_ref[...] = q[:, : q_ref.shape[1]].astype(q_ref.dtype)


# --------------------------------------------------------------------------- #
# Wrapper
# --------------------------------------------------------------------------- #
def _pick_batch_tile(B):
    # Largest tile <= 8192 that divides B, is a multiple of 8 (sublane rule),
    # and leaves >= 2 grid steps (feeds both v7x TensorCores / overlaps DMA).
    cap = min(B // 2, 8192)
    start = cap - (cap % 8)
    for tb in range(start, 7, -8):
        if B % tb == 0:
            return tb
    # Fallback: single full-array step (legal; serializes onto one v7x TC).
    return B


def dueling_forward(x, packed, out_dim, *, batch_tile=None):
    """x: [B, in_dim] f32 or bf16. packed: output of pack_params(). Returns [B, out_dim] f32."""
    B, in_dim = x.shape

    tb = batch_tile if batch_tile is not None else _pick_batch_tile(B)
    assert B % tb == 0, "batch must be divisible by batch tile"

    def full_spec(arr):
        shape = arr.shape
        # Constant index_map -> grid-invariant block: stays resident, no per-step DMA.
        return pl.BlockSpec(shape, lambda i, _n=len(shape): (0,) * _n)

    in_specs = [
        pl.BlockSpec((tb, in_dim), lambda i: (i, 0)),
        full_spec(packed["w1"]), full_spec(packed["b1"]),
        full_spec(packed["wh"]), full_spec(packed["bh"]),
        full_spec(packed["wq"]), full_spec(packed["bq"]),
    ]
    # Unpadded output block: last dim == full array dim, so the (8,128) rule is
    # satisfied and no padded HBM traffic / wrapper slice is needed.
    out_spec = pl.BlockSpec((tb, out_dim), lambda i: (i, 0))

    q = pl.pallas_call(
        dueling_kernel,
        out_shape=jax.ShapeDtypeStruct((B, out_dim), jnp.float32),
        grid_spec=pltpu.PrefetchScalarGridSpec(
            num_scalar_prefetch=0,
            grid=(B // tb,),
            in_specs=in_specs,
            out_specs=out_spec,
        ),
        compiler_params=pltpu.CompilerParams(
            dimension_semantics=("parallel",),
        ),
    )(
        x,
        packed["w1"], packed["b1"],
        packed["wh"], packed["bh"],
        packed["wq"], packed["bq"],
    )
    return q


# --------------------------------------------------------------------------- #
# Parameter init (PyTorch-Linear-like) and host-side packing
# --------------------------------------------------------------------------- #
def init_params(key, in_dim, out_dim, layer_num):
    """Weights stored [fan_in, fan_out], f32."""
    ks = jax.random.split(key, 10)

    def linear(kw, kb, fan_in, fan_out):
        bound = 1.0 / jnp.sqrt(fan_in)
        w = jax.random.uniform(kw, (fan_in, fan_out), jnp.float32, -bound, bound)
        b = jax.random.uniform(kb, (1, fan_out), jnp.float32, -bound, bound)
        return w, b

    w1, b1 = linear(ks[0], ks[1], in_dim, layer_num)
    wa1, ba1 = linear(ks[2], ks[3], layer_num, layer_num)
    wa2, ba2 = linear(ks[4], ks[5], layer_num, out_dim)
    wv1, bv1 = linear(ks[6], ks[7], layer_num, layer_num)
    wv2, bv2 = linear(ks[8], ks[9], layer_num, 1)
    return dict(w1=w1, b1=b1, wa1=wa1, ba1=ba1, wa2=wa2, ba2=ba2,
                wv1=wv1, bv1=bv1, wv2=wv2, bv2=bv2)


def _round_up(n, m):
    return ((n + m - 1) // m) * m


def pack_params(p):
    """Fuse advantage/value heads, fold the dueling combine into the weights,
    and zero-pad all hidden/output weight dims to lane-dense multiples of 128.

    q = val + adv - adv.mean(-1)
      = h_a @ (wa2 - rowmean(wa2)) + (ba2 - mean(ba2)) + h_v @ wv2 + bv2
    so with h = [h_a | h_v | 0...] (fused, padded hidden activations), q = h @ wq + bq.
    Padding is exact: padded weight/bias entries are 0, so padded lanes of feat/h
    are relu(0) = 0 and contribute nothing.
    """
    in_dim, H = p["w1"].shape
    out_dim = p["wa2"].shape[1]

    Hp = _round_up(H, 128)          # feature lanes (w1 out, wh in)
    HHp = _round_up(2 * H, 128)     # fused hidden lanes (wh out, wq in)
    out_pad = _round_up(out_dim, 128)

    # feature layer: [in_dim, Hp]
    w1 = jnp.zeros((in_dim, Hp), jnp.float32).at[:, :H].set(p["w1"])
    b1 = jnp.zeros((1, Hp), jnp.float32).at[:, :H].set(p["b1"][0])

    # fused adv|val hidden layer: [Hp, HHp]  (adv in cols 0:H, val in cols H:2H)
    wh = jnp.zeros((Hp, HHp), jnp.float32)
    wh = wh.at[:H, :H].set(p["wa1"]).at[:H, H:2 * H].set(p["wv1"])
    bh = jnp.zeros((1, HHp), jnp.float32)
    bh = bh.at[:, :H].set(p["ba1"][0]).at[:, H:2 * H].set(p["bv1"][0])

    # fused output with dueling combine folded in: [HHp, out_pad]
    wa2c = p["wa2"] - p["wa2"].mean(axis=1, keepdims=True)
    wv2b = jnp.broadcast_to(p["wv2"], (H, out_dim))
    wq = jnp.zeros((HHp, out_pad), jnp.float32)
    wq = wq.at[:H, :out_dim].set(wa2c).at[H:2 * H, :out_dim].set(wv2b)
    bq = jnp.zeros((1, out_pad), jnp.float32)
    bq = bq.at[:, :out_dim].set(((p["ba2"] - p["ba2"].mean()) + p["bv2"])[0])

    # bf16 weights (MXU-native), f32 biases (added after f32 accumulation).
    return dict(
        w1=w1.astype(jnp.bfloat16), b1=b1,
        wh=wh.astype(jnp.bfloat16), bh=bh,
        wq=wq.astype(jnp.bfloat16), bq=bq,
    )


# --------------------------------------------------------------------------- #
# References
# --------------------------------------------------------------------------- #
def dueling_forward_ref_f32(x, p):
    """Pure-JAX f32 reference of the exact PyTorch forward."""
    feat = jax.nn.relu(x @ p["w1"] + p["b1"])
    adv = jax.nn.relu(feat @ p["wa1"] + p["ba1"]) @ p["wa2"] + p["ba2"]
    val = jax.nn.relu(feat @ p["wv1"] + p["bv1"]) @ p["wv2"] + p["bv2"]
    return val + adv - adv.mean(axis=-1, keepdims=True)


def dueling_forward_ref_packed(x, packed, out_dim):
    """Same fused/padded/bf16 math as the kernel (tight numerical check)."""
    f32 = jnp.float32
    feat = jax.nn.relu(jnp.dot(x.astype(jnp.bfloat16), packed["w1"],
                               preferred_element_type=f32) + packed["b1"])
    h = jax.nn.relu(jnp.dot(feat.astype(jnp.bfloat16), packed["wh"],
                            preferred_element_type=f32) + packed["bh"])
    q = jnp.dot(h.astype(jnp.bfloat16), packed["wq"],
                preferred_element_type=f32) + packed["bq"]
    return q[:, :out_dim]


# --------------------------------------------------------------------------- #
if __name__ == "__main__":
    in_dim, out_dim, layer_num = 16, 4, 32
    batch = 16  # 2 grid steps of tb=8 -> exercises the pipeline / both v7x TCs

    key = jax.random.PRNGKey(0)
    kx, kp = jax.random.split(key)
    x = jax.random.normal(kx, (batch, in_dim), jnp.float32)
    params = init_params(kp, in_dim, out_dim, layer_num)
    packed = pack_params(params)

    q = dueling_forward(x, packed, out_dim)
    q = jax.block_until_ready(q)
    assert q.shape == (batch, out_dim)

    # Tight check against the bf16/fused/padded reference (same math path).
    q_ref_packed = dueling_forward_ref_packed(x, packed, out_dim)
    assert jnp.allclose(q, q_ref_packed, atol=1e-4, rtol=1e-4), "mismatch vs fused bf16 reference"

    # Looser check against the exact f32 PyTorch-semantics reference
    # (difference is only bf16 weight/activation rounding).
    q_ref = dueling_forward_ref_f32(x, params)
    assert jnp.allclose(q, q_ref, atol=2e-2, rtol=2e-2), "mismatch vs f32 reference"

    print("KERNEL_OK")
</pallas_src>

<mosaic_0001>
module attributes {stable_mosaic.version = 11 : i64} {
  func.func @dueling_kernel(%arg0: i32, %arg1: memref<8x16xf32, #tpu.memory_space<vmem>>, %arg2: memref<16x128xbf16, #tpu.memory_space<vmem>>, %arg3: memref<1x128xf32, #tpu.memory_space<vmem>>, %arg4: memref<128x128xbf16, #tpu.memory_space<vmem>>, %arg5: memref<1x128xf32, #tpu.memory_space<vmem>>, %arg6: memref<128x128xbf16, #tpu.memory_space<vmem>>, %arg7: memref<1x128xf32, #tpu.memory_space<vmem>>, %arg8: memref<8x4xf32, #tpu.memory_space<vmem>>) attributes {dimension_semantics = [#tpu.dimension_semantics<parallel>], iteration_bounds = array<i64: 2>, scalar_prefetch = 0 : i64, scratch_operands = 0 : i64, tpu.core_type = #tpu.core_type<tc>, window_params = [{transform_indices = @transform_0, window_bounds = array<i64: 8, 16>}, {pipeline_mode = #tpu.pipeline_mode<synchronous>, transform_indices = @transform_1, window_bounds = array<i64: 16, 128>}, {pipeline_mode = #tpu.pipeline_mode<synchronous>, transform_indices = @transform_2, window_bounds = array<i64: 1, 128>}, {pipeline_mode = #tpu.pipeline_mode<synchronous>, transform_indices = @transform_3, window_bounds = array<i64: 128, 128>}, {pipeline_mode = #tpu.pipeline_mode<synchronous>, transform_indices = @transform_4, window_bounds = array<i64: 1, 128>}, {pipeline_mode = #tpu.pipeline_mode<synchronous>, transform_indices = @transform_5, window_bounds = array<i64: 128, 128>}, {pipeline_mode = #tpu.pipeline_mode<synchronous>, transform_indices = @transform_6, window_bounds = array<i64: 1, 128>}, {transform_indices = @transform_7, window_bounds = array<i64: 8, 4>}]} {
    %c0 = arith.constant 0 : index
    %c0_0 = arith.constant 0 : index
    %0 = vector.load %arg1[%c0, %c0_0] : memref<8x16xf32, #tpu.memory_space<vmem>>, vector<8x16xf32>
    %1 = arith.truncf %0 : vector<8x16xf32> to vector<8x16xbf16>
    %c0_1 = arith.constant 0 : index
    %c0_2 = arith.constant 0 : index
    %2 = vector.load %arg2[%c0_1, %c0_2] : memref<16x128xbf16, #tpu.memory_space<vmem>>, vector<16x128xbf16>
    %cst = arith.constant dense<0.000000e+00> : vector<8x128xf32>
    %3 = tpu.matmul %1, %2, %cst {dimension_numbers = #tpu.dot_dimension_numbers<[1], [0], [0], [1], [0, 0, 1, 1], [], []>} : vector<8x16xbf16>, vector<16x128xbf16>, vector<8x128xf32> -> vector<8x128xf32>
    %c0_3 = arith.constant 0 : index
    %c0_4 = arith.constant 0 : index
    %4 = vector.load %arg3[%c0_3, %c0_4] : memref<1x128xf32, #tpu.memory_space<vmem>>, vector<1x128xf32>
    %5 = vector.broadcast %4 : vector<1x128xf32> to vector<8x128xf32>
    %6 = arith.addf %3, %5 : vector<8x128xf32>
    %cst_5 = arith.constant 0.000000e+00 : f32
    %7 = vector.broadcast %cst_5 : f32 to vector<8x128xf32>
    %8 = arith.maximumf %6, %7 : vector<8x128xf32>
    %9 = arith.truncf %8 : vector<8x128xf32> to vector<8x128xbf16>
    %c0_6 = arith.constant 0 : index
    %c0_7 = arith.constant 0 : index
    %10 = vector.load %arg4[%c0_6, %c0_7] : memref<128x128xbf16, #tpu.memory_space<vmem>>, vector<128x128xbf16>
    %cst_8 = arith.constant dense<0.000000e+00> : vector<8x128xf32>
    %11 = tpu.matmul %9, %10, %cst_8 {dimension_numbers = #tpu.dot_dimension_numbers<[1], [0], [0], [1], [0, 0, 1, 1], [], []>} : vector<8x128xbf16>, vector<128x128xbf16>, vector<8x128xf32> -> vector<8x128xf32>
    %c0_9 = arith.constant 0 : index
    %c0_10 = arith.constant 0 : index
    %12 = vector.load %arg5[%c0_9, %c0_10] : memref<1x128xf32, #tpu.memory_space<vmem>>, vector<1x128xf32>
    %13 = vector.broadcast %12 : vector<1x128xf32> to vector<8x128xf32>
    %14 = arith.addf %11, %13 : vector<8x128xf32>
    %cst_11 = arith.constant 0.000000e+00 : f32
    %15 = vector.broadcast %cst_11 : f32 to vector<8x128xf32>
    %16 = arith.maximumf %14, %15 : vector<8x128xf32>
    %17 = arith.truncf %16 : vector<8x128xf32> to vector<8x128xbf16>
    %c0_12 = arith.constant 0 : index
    %c0_13 = arith.constant 0 : index
    %18 = vector.load %arg6[%c0_12, %c0_13] : memref<128x128xbf16, #tpu.memory_space<vmem>>, vector<128x128xbf16>
    %cst_14 = arith.constant dense<0.000000e+00> : vector<8x128xf32>
    %19 = tpu.matmul %17, %18, %cst_14 {dimension_numbers = #tpu.dot_dimension_numbers<[1], [0], [0], [1], [0, 0, 1, 1], [], []>} : vector<8x128xbf16>, vector<128x128xbf16>, vector<8x128xf32> -> vector<8x128xf32>
    %c0_15 = arith.constant 0 : index
    %c0_16 = arith.constant 0 : index
    %20 = vector.load %arg7[%c0_15, %c0_16] : memref<1x128xf32, #tpu.memory_space<vmem>>, vector<1x128xf32>
    %21 = vector.broadcast %20 : vector<1x128xf32> to vector<8x128xf32>
    %22 = arith.addf %19, %21 : vector<8x128xf32>
    %23 = vector.extract_strided_slice %22 {offsets = [0, 0], sizes = [8, 4], strides = [1, 1]} : vector<8x128xf32> to vector<8x4xf32>
    %c0_17 = arith.constant 0 : index
    %c0_18 = arith.constant 0 : index
    %24 = vector.load %arg8[%c0_17, %c0_18] : memref<8x4xf32, #tpu.memory_space<vmem>>, vector<8x4xf32>
    tpu.vector_store %arg8[%c0_17, %c0_18], %23 {strides = array<i32>} : memref<8x4xf32, #tpu.memory_space<vmem>>, vector<8x4xf32>,
    return
  }
  func.func @transform_0(%arg0: i32) -> (i32, i32) {
    %c0_i32 = arith.constant 0 : i32
    %c0_i32_0 = arith.constant 0 : i32
    return %arg0, %c0_i32 : i32, i32
  }
  func.func @transform_1(%arg0: i32) -> (i32, i32) {
    %c0_i32 = arith.constant 0 : i32
    %c0_i32_0 = arith.constant 0 : i32
    %c0_i32_1 = arith.constant 0 : i32
    return %c0_i32, %c0_i32_0 : i32, i32
  }
  func.func @transform_2(%arg0: i32) -> (i32, i32) {
    %c0_i32 = arith.constant 0 : i32
    %c0_i32_0 = arith.constant 0 : i32
    %c0_i32_1 = arith.constant 0 : i32
    return %c0_i32, %c0_i32_0 : i32, i32
  }
  func.func @transform_3(%arg0: i32) -> (i32, i32) {
    %c0_i32 = arith.constant 0 : i32
    %c0_i32_0 = arith.constant 0 : i32
    %c0_i32_1 = arith.constant 0 : i32
    return %c0_i32, %c0_i32_0 : i32, i32
  }
  func.func @transform_4(%arg0: i32) -> (i32, i32) {
    %c0_i32 = arith.constant 0 : i32
    %c0_i32_0 = arith.constant 0 : i32
    %c0_i32_1 = arith.constant 0 : i32
    return %c0_i32, %c0_i32_0 : i32, i32
  }
  func.func @transform_5(%arg0: i32) -> (i32, i32) {
    %c0_i32 = arith.constant 0 : i32
    %c0_i32_0 = arith.constant 0 : i32
    %c0_i32_1 = arith.constant 0 : i32
    return %c0_i32, %c0_i32_0 : i32, i32
  }
  func.func @transform_6(%arg0: i32) -> (i32, i32) {
    %c0_i32 = arith.constant 0 : i32
    %c0_i32_0 = arith.constant 0 : i32
    %c0_i32_1 = arith.constant 0 : i32
    return %c0_i32, %c0_i32_0 : i32, i32
  }
  func.func @transform_7(%arg0: i32) -> (i32, i32) {
    %c0_i32 = arith.constant 0 : i32
    %c0_i32_0 = arith.constant 0 : i32
    return %arg0, %c0_i32 : i32, i32
  }
}

</mosaic_0001>

<llo_original>
// kernel: tpu_custom_call.1
$region0: #{tpu_custom_call.1}
  #allocation0 [shape = 'u32[]', space=smem, size = 0x4, offset = 0x4, fixed_abs, tag = 'smem constant byte address 0x4 - core index']
  #allocation1 [shape = 'u32[144,128]{1,0:T(1,128)}', space=vmem, size = 0x12000, scoped, tag = 'internal scratch']
  %s0 = inlined_call_operand.hbm [shape: f32[16,16], index: 0, kind: input, shape index: {}]
  %s1 = inlined_call_operand.hbm [shape: bf16[16,128], index: 1, kind: input, shape index: {}]
  %s2 = inlined_call_operand.vmem [shape: f32[1,128], index: 2, kind: input, shape index: {}]
  %s3 = inlined_call_operand.hbm [shape: bf16[128,128], index: 3, kind: input, shape index: {}]
  %s4 = inlined_call_operand.vmem [shape: f32[1,128], index: 4, kind: input, shape index: {}]
  %s5 = inlined_call_operand.hbm [shape: bf16[128,128], index: 5, kind: input, shape index: {}]
  %s6 = inlined_call_operand.vmem [shape: f32[1,128], index: 6, kind: input, shape index: {}]
  %s7 = inlined_call_operand.vmem [shape: f32[16,4], index: 7, kind: output, shape index: {}]
  %s8 = sld [smem:[#allocation0]]
  $region77: #{tpu_custom_call.1} parent=0
    _
  %s10 = ssub.s32 1, %s8
  %s11 = scalar_select 0, %s10, %s8
  $region1: #{tpu_custom_call.1} parent=0
    #allocation2 [shape = 'u8[8192]{0}', space=vmem, size = 0x2000, scoped, tag = 'input window, operand 0']
    #allocation3 [shape = 's32[2]{0}', space=sflag, size = 0x8, scoped, tag = 'scoped memory for tpu_custom_call.1']
    #allocation4 [shape = 'u8[4096]{0}', space=vmem, size = 0x1000, scoped, tag = 'input window, operand 1, single buffered']
    #allocation5 [shape = 's32[1]{0}', space=sflag, size = 0x4, scoped, tag = 'scoped memory for tpu_custom_call.1']
    #allocation6 [shape = 'u8[32768]{0}', space=vmem, size = 0x8000, scoped, tag = 'input window, operand 3, single buffered']
    #allocation7 [shape = 'u8[32768]{0}', space=vmem, size = 0x8000, scoped, tag = 'input window, operand 5, single buffered']
    #allocation8 [shape = 's32[1]{0}', space=sflag, size = 0x4, scoped, tag = 'scoped memory for tpu_custom_call.1']
    %12 = vsyncpa [#allocation3], 0
    %s13 = scalar_lea.sflag [#allocation3], 1
    %14 = vsyncpa %s13, 0
    %15 = vsyncpa [#allocation5], 0
    %16 = vsyncpa [#allocation8], 0
    loop: start=0, step=1, limit=4
    $region2: #{tpu_custom_call.1} parent=1 // loop_pre_header
      _
    $region3: #{tpu_custom_call.1} parent=1 // loop_header
      %s18 = sphi 0, %s22
      %p19 = scmp.ge.s32.totalorder %s18, 4
      %s28 = sphi 0, %s30
      %s31 = sphi 0, %s28
      %s32 = sphi 0, %s31
      %s48 = sphi 0, %s32
      %s52 = sphi 0, %s52
      %s54 = sphi 0, %s52
      %s55 = sphi 0, %s54
      %s69 = sphi 0, %s55
      %s73 = sphi 0, %s73
      %s75 = sphi 0, %s73
      %s76 = sphi 0, %s75
      %s90 = sphi 0, %s76
      %s94 = sphi 0, %s94
      %s96 = sphi 0, %s94
      %s97 = sphi 0, %s96
      %s111 = sphi 0, %s97
      %s115 = sphi 0, %s115
      %s117 = sphi 0, %s115
      %s118 = sphi 0, %s117
      %s132 = sphi 0, %s118
      %s136 = sphi 0, %s136
      %s138 = sphi 0, %s136
      %s139 = sphi 0, %s138
      %s153 = sphi 0, %s139
      %s157 = sphi 0, %s157
      %s159 = sphi 0, %s157
      %s160 = sphi 0, %s159
      %s174 = sphi 0, %s160
      %s180 = sphi 0, %s182
      %s183 = sphi 0, %s180
      %s184 = sphi 0, %s183
      %s200 = sphi 0, %s184
    $region4: #{tpu_custom_call.1} parent=1 // loop_header_branch
      %21 = sbr.rel (%p19) target = $region8
    $region5: #{tpu_custom_call.1} parent=1 // loop_body
      %s23 = ssub.s32 %s18, 1
      %s24 = ssub.s32 %s18, 2
      %s25 = sadd.s32 %s18, 1
      %s26 = ssub.s32 %s18, %s25
      %p27 = scmp.eq.s32.totalorder %s26, 0
      %s29 = sadd.s32 %s28, 1
      %s30 = scalar_select %p27, %s28, %s29
      %p33 = pneg %p27
      %p34 = scmp.eq.s32.totalorder %s18, 1
      %p35 = por %p33, %p34
      %p36 = scmp.ne.s32.totalorder %s28, %s31
      %p37 = scmp.eq.s32.totalorder %s18, 0
      %p38 = por %p36, %p37
      %p39 = scmp.ne.s32.totalorder %s28, %s31
      %p40 = scmp.eq.s32.totalorder %s23, 1
      %p41 = por %p39, %p40
      %p42 = scmp.ne.s32.totalorder %s31, %s32
      %p43 = scmp.eq.s32.totalorder %s23, 0
      %p44 = por %p42, %p43
      %p45 = scmp.ne.s32.totalorder %s31, %s32
      %p46 = scmp.eq.s32.totalorder %s24, 1
      %p47 = por %p45, %p46
      %p49 = scmp.ne.s32.totalorder %s32, %s48
      %p50 = scmp.eq.s32.totalorder %s24, 0
      %p51 = por %p49, %p50
      %s53 = sadd.s32 %s52, 1
      %p56 = scmp.eq.s32.totalorder %s18, 1
      %p57 = scmp.ne.s32.totalorder %s52, %s54
      %p58 = scmp.eq.s32.totalorder %s18, 0
      %p59 = por %p57, %p58
      %p60 = scmp.ne.s32.totalorder %s52, %s54
      %p61 = scmp.eq.s32.totalorder %s23, 1
      %p62 = por %p60, %p61
      %p63 = scmp.ne.s32.totalorder %s54, %s55
      %p64 = scmp.eq.s32.totalorder %s23, 0
      %p65 = por %p63, %p64
      %p66 = scmp.ne.s32.totalorder %s54, %s55
      %p67 = scmp.eq.s32.totalorder %s24, 1
      %p68 = por %p66, %p67
      %p70 = scmp.ne.s32.totalorder %s55, %s69
      %p71 = scmp.eq.s32.totalorder %s24, 0
      %p72 = por %p70, %p71
      %s74 = sadd.s32 %s73, 1
      %p77 = scmp.eq.s32.totalorder %s18, 1
      %p78 = scmp.ne.s32.totalorder %s73, %s75
      %p79 = scmp.eq.s32.totalorder %s18, 0
      %p80 = por %p78, %p79
      %p81 = scmp.ne.s32.totalorder %s73, %s75
      %p82 = scmp.eq.s32.totalorder %s23, 1
      %p83 = por %p81, %p82
      %p84 = scmp.ne.s32.totalorder %s75, %s76
      %p85 = scmp.eq.s32.totalorder %s23, 0
      %p86 = por %p84, %p85
      %p87 = scmp.ne.s32.totalorder %s75, %s76
      %p88 = scmp.eq.s32.totalorder %s24, 1
      %p89 = por %p87, %p88
      %p91 = scmp.ne.s32.totalorder %s76, %s90
      %p92 = scmp.eq.s32.totalorder %s24, 0
      %p93 = por %p91, %p92
      %s95 = sadd.s32 %s94, 1
      %p98 = scmp.eq.s32.totalorder %s18, 1
      %p99 = scmp.ne.s32.totalorder %s94, %s96
      %p100 = scmp.eq.s32.totalorder %s18, 0
      %p101 = por %p99, %p100
      %p102 = scmp.ne.s32.totalorder %s94, %s96
      %p103 = scmp.eq.s32.totalorder %s23, 1
      %p104 = por %p102, %p103
      %p105 = scmp.ne.s32.totalorder %s96, %s97
      %p106 = scmp.eq.s32.totalorder %s23, 0
      %p107 = por %p105, %p106
      %p108 = scmp.ne.s32.totalorder %s96, %s97
      %p109 = scmp.eq.s32.totalorder %s24, 1
      %p110 = por %p108, %p109
      %p112 = scmp.ne.s32.totalorder %s97, %s111
      %p113 = scmp.eq.s32.totalorder %s24, 0
      %p114 = por %p112, %p113
      %s116 = sadd.s32 %s115, 1
      %p119 = scmp.eq.s32.totalorder %s18, 1
      %p120 = scmp.ne.s32.totalorder %s115, %s117
      %p121 = scmp.eq.s32.totalorder %s18, 0
      %p122 = por %p120, %p121
      %p123 = scmp.ne.s32.totalorder %s115, %s117
      %p124 = scmp.eq.s32.totalorder %s23, 1
      %p125 = por %p123, %p124
      %p126 = scmp.ne.s32.totalorder %s117, %s118
      %p127 = scmp.eq.s32.totalorder %s23, 0
      %p128 = por %p126, %p127
      %p129 = scmp.ne.s32.totalorder %s117, %s118
      %p130 = scmp.eq.s32.totalorder %s24, 1
      %p131 = por %p129, %p130
      %p133 = scmp.ne.s32.totalorder %s118, %s132
      %p134 = scmp.eq.s32.totalorder %s24, 0
      %p135 = por %p133, %p134
      %s137 = sadd.s32 %s136, 1
      %p140 = scmp.eq.s32.totalorder %s18, 1
      %p141 = scmp.ne.s32.totalorder %s136, %s138
      %p142 = scmp.eq.s32.totalorder %s18, 0
      %p143 = por %p141, %p142
      %p144 = scmp.ne.s32.totalorder %s136, %s138
      %p145 = scmp.eq.s32.totalorder %s23, 1
      %p146 = por %p144, %p145
      %p147 = scmp.ne.s32.totalorder %s138, %s139
      %p148 = scmp.eq.s32.totalorder %s23, 0
      %p149 = por %p147, %p148
      %p150 = scmp.ne.s32.totalorder %s138, %s139
      %p151 = scmp.eq.s32.totalorder %s24, 1
      %p152 = por %p150, %p151
      %p154 = scmp.ne.s32.totalorder %s139, %s153
      %p155 = scmp.eq.s32.totalorder %s24, 0
      %p156 = por %p154, %p155
      %s158 = sadd.s32 %s157, 1
      %p161 = scmp.eq.s32.totalorder %s18, 1
      %p162 = scmp.ne.s32.totalorder %s157, %s159
      %p163 = scmp.eq.s32.totalorder %s18, 0
      %p164 = por %p162, %p163
      %p165 = scmp.ne.s32.totalorder %s157, %s159
      %p166 = scmp.eq.s32.totalorder %s23, 1
      %p167 = por %p165, %p166
      %p168 = scmp.ne.s32.totalorder %s159, %s160
      %p169 = scmp.eq.s32.totalorder %s23, 0
      %p170 = por %p168, %p169
      %p171 = scmp.ne.s32.totalorder %s159, %s160
      %p172 = scmp.eq.s32.totalorder %s24, 1
      %p173 = por %p171, %p172
      %p175 = scmp.ne.s32.totalorder %s160, %s174
      %p176 = scmp.eq.s32.totalorder %s24, 0
      %p177 = por %p175, %p176
      %s178 = ssub.s32 %s18, %s25
      %p179 = scmp.eq.s32.totalorder %s178, 0
      %s181 = sadd.s32 %s180, 1
      %s182 = scalar_select %p179, %s180, %s181
      %p185 = pneg %p179
      %p186 = scmp.eq.s32.totalorder %s18, 1
      %p187 = por %p185, %p186
      %p188 = scmp.ne.s32.totalorder %s180, %s183
      %p189 = scmp.eq.s32.totalorder %s18, 0
      %p190 = por %p188, %p189
      %p191 = scmp.ne.s32.totalorder %s180, %s183
      %p192 = scmp.eq.s32.totalorder %s23, 1
      %p193 = por %p191, %p192
      %p194 = scmp.ne.s32.totalorder %s183, %s184
      %p195 = scmp.eq.s32.totalorder %s23, 0
      %p196 = por %p194, %p195
      %p197 = scmp.ne.s32.totalorder %s183, %s184
      %p198 = scmp.eq.s32.totalorder %s24, 1
      %p199 = por %p197, %p198
      %p201 = scmp.ne.s32.totalorder %s184, %s200
      %p202 = scmp.eq.s32.totalorder %s24, 0
      %p203 = por %p201, %p202
      %p204 = scmp.le.s32.totalorder 1, %s18
      %p205 = scmp.lt.s32.totalorder %s18, 3
      %p206 = pnand %p204, %p205
      %p207 = pneg %p206
      // Predicated region
      $region9: #{tpu_custom_call.1} parent=5 // pred_check
        _
      $region10: #{tpu_custom_call.1} parent=5 // pred_check_branch
        %209 = sbr.rel (%p206) target = $region12
      $region11: #{tpu_custom_call.1} parent=5 // pred_region
        %s210 = ssub.s32 %s18, 1
        // Predicated region
        $region13: #{tpu_custom_call.1} parent=11 // pred_check
          %p211 = pneg %p65
        $region14: #{tpu_custom_call.1} parent=11 // pred_check_branch
          %213 = sbr.rel (%p211) target = $region16
        $region15: #{tpu_custom_call.1} parent=11 // pred_region
          %s215 = ssub.s32 128, 128
          %216 = vsyncadd [#allocation5], %s215
          %s217 = sshll.u32 [#allocation4], 4
          %s218 = int_to_ptr.vmem [resolvable:$true] %s217
          %223 = dma.hbm_to_vmem [thread:$0]  %s1, 128, %s218, [#allocation5], 64, 64, 4
        $region16: #{tpu_custom_call.1} parent=11 // pred_fallthru
          _
        // Predicated region
        $region17: #{tpu_custom_call.1} parent=11 // pred_check
          %p224 = pneg %p86
        $region18: #{tpu_custom_call.1} parent=11 // pred_check_branch
          %226 = sbr.rel (%p224) target = $region20
        $region19: #{tpu_custom_call.1} parent=11 // pred_region
          _
        $region20: #{tpu_custom_call.1} parent=11 // pred_fallthru
          _
        // Predicated region
        $region21: #{tpu_custom_call.1} parent=11 // pred_check
          %p227 = pneg %p107
        $region22: #{tpu_custom_call.1} parent=11 // pred_check_branch
          %229 = sbr.rel (%p227) target = $region24
        $region23: #{tpu_custom_call.1} parent=11 // pred_region
          %s231 = ssub.s32 1024, 1024
          %232 = vsyncadd [#allocation5], %s231
          %s233 = sshll.u32 [#allocation6], 4
          %s234 = int_to_ptr.vmem [resolvable:$true] %s233
          %239 = dma.hbm_to_vmem [thread:$0]  %s3, 1024, %s234, [#allocation5], 64, 64, 4
        $region24: #{tpu_custom_call.1} parent=11 // pred_fallthru
          _
        // Predicated region
        $region25: #{tpu_custom_call.1} parent=11 // pred_check
          %p240 = pneg %p128
        $region26: #{tpu_custom_call.1} parent=11 // pred_check_branch
          %242 = sbr.rel (%p240) target = $region28
        $region27: #{tpu_custom_call.1} parent=11 // pred_region
          _
        $region28: #{tpu_custom_call.1} parent=11 // pred_fallthru
          _
        // Predicated region
        $region29: #{tpu_custom_call.1} parent=11 // pred_check
          %p243 = pneg %p149
        $region30: #{tpu_custom_call.1} parent=11 // pred_check_branch
          %245 = sbr.rel (%p243) target = $region32
        $region31: #{tpu_custom_call.1} parent=11 // pred_region
          %s247 = ssub.s32 1024, 1024
          %248 = vsyncadd [#allocation8], %s247
          %s249 = sshll.u32 [#allocation7], 4
          %s250 = int_to_ptr.vmem [resolvable:$true] %s249
          %255 = dma.hbm_to_vmem [thread:$0]  %s5, 1024, %s250, [#allocation8], 64, 64, 4
        $region32: #{tpu_custom_call.1} parent=11 // pred_fallthru
          _
        // Predicated region
        $region33: #{tpu_custom_call.1} parent=11 // pred_check
          %p256 = pneg %p170
        $region34: #{tpu_custom_call.1} parent=11 // pred_check_branch
          %258 = sbr.rel (%p256) target = $region36
        $region35: #{tpu_custom_call.1} parent=11 // pred_region
          _
        $region36: #{tpu_custom_call.1} parent=11 // pred_fallthru
          _
      $region12: #{tpu_custom_call.1} parent=5 // pred_fallthru
        _
      %p259 = scmp.lt.s32.totalorder %s18, 2
      // Predicated region
      $region37: #{tpu_custom_call.1} parent=5 // pred_check
        %p260 = pneg %p259
      $region38: #{tpu_custom_call.1} parent=5 // pred_check_branch
        %262 = sbr.rel (%p260) target = $region40
      $region39: #{tpu_custom_call.1} parent=5 // pred_region
        // Predicated region
        $region41: #{tpu_custom_call.1} parent=39 // pred_check
          %p263 = pneg %p38
        $region42: #{tpu_custom_call.1} parent=39 // pred_check_branch
          %265 = sbr.rel (%p263) target = $region44
        $region43: #{tpu_custom_call.1} parent=39 // pred_region
          %s266 = sand.u32 %s28, 1
          %s267 = scalar_lea.sflag [#allocation3], %s266
          %s268 = sand.u32 %s28, 1
          %s269 = smul.addr %s268, 8
          %s270 = scalar_lea.vmem [#allocation2], %s269
          %s272 = ssub.s32 128, 128
          %273 = vsyncadd %s267, %s272
          %s274 = smul.addr %s18, 128
          %s275 = scalar_lea.hbm %s0, %s274
          %s277 = sshll.u32 %s270, 4
          %s278 = int_to_ptr.vmem [resolvable:$true] %s277
          %280 = dma.hbm_to_vmem [thread:$0]  %s275, 128, %s278, %s267
        $region44: #{tpu_custom_call.1} parent=39 // pred_fallthru
          _
      $region40: #{tpu_custom_call.1} parent=5 // pred_fallthru
        _
      %p281 = scmp.le.s32.totalorder 1, %s18
      %p282 = scmp.lt.s32.totalorder %s18, 3
      %p283 = pnand %p281, %p282
      %p284 = pneg %p283
      // Predicated region
      $region45: #{tpu_custom_call.1} parent=5 // pred_check
        _
      $region46: #{tpu_custom_call.1} parent=5 // pred_check_branch
        %286 = sbr.rel (%p283) target = $region48
      $region47: #{tpu_custom_call.1} parent=5 // pred_region
        %s287 = ssub.s32 %s18, 1
        %s288 = sand.u32 %s31, 1
        %s289 = scalar_lea.sflag [#allocation3], %s288
        %s290 = sand.u32 %s31, 1
        %s291 = smul.addr %s290, 8
        %s292 = scalar_lea.vmem [#allocation2], %s291
        // Predicated region
        $region49: #{tpu_custom_call.1} parent=47 // pred_check
          %p293 = pneg %p44
        $region50: #{tpu_custom_call.1} parent=47 // pred_check_branch
          %295 = sbr.rel (%p293) target = $region52
        $region51: #{tpu_custom_call.1} parent=47 // pred_region
          %296 = dma.done %s289, 128
        $region52: #{tpu_custom_call.1} parent=47 // pred_fallthru
          _
        // Predicated region
        $region53: #{tpu_custom_call.1} parent=47 // pred_check
          %p297 = pneg %p65
        $region54: #{tpu_custom_call.1} parent=47 // pred_check_branch
          %299 = sbr.rel (%p297) target = $region56
        $region55: #{tpu_custom_call.1} parent=47 // pred_region
          %300 = dma.done [#allocation5], 128
        $region56: #{tpu_custom_call.1} parent=47 // pred_fallthru
          _
        // Predicated region
        $region57: #{tpu_custom_call.1} parent=47 // pred_check
          %p301 = pneg %p107
        $region58: #{tpu_custom_call.1} parent=47 // pred_check_branch
          %303 = sbr.rel (%p301) target = $region60
        $region59: #{tpu_custom_call.1} parent=47 // pred_region
          %304 = dma.done [#allocation5], 1024
        $region60: #{tpu_custom_call.1} parent=47 // pred_fallthru
          _
        // Predicated region
        $region61: #{tpu_custom_call.1} parent=47 // pred_check
          %p305 = pneg %p149
        $region62: #{tpu_custom_call.1} parent=47 // pred_check_branch
          %307 = sbr.rel (%p305) target = $region64
        $region63: #{tpu_custom_call.1} parent=47 // pred_region
          %308 = dma.done [#allocation8], 1024
        $region64: #{tpu_custom_call.1} parent=47 // pred_fallthru
          _
        %s309 = sand.u32 %s31, 1
        %s310 = scalar_lea.sflag [#allocation3], %s309
        %s311 = sand.u32 %s31, 1
        %s312 = smul.addr %s311, 8
        %s313 = scalar_lea.vmem [#allocation2], %s312
        %p314 = pneg %p44
        %p315 = pneg %p41
        %p316 = pneg %p65
        %p317 = pneg %p62
        %p318 = pneg %p86
        %p319 = pneg %p83
        %p320 = pneg %p107
        %p321 = pneg %p104
        %p322 = pneg %p128
        %p323 = pneg %p125
        %p324 = pneg %p149
        %p325 = pneg %p146
        %p326 = pneg %p170
        %p327 = pneg %p167
        %p328 = pneg %p196
        %p329 = pneg %p193
        %p330 = scmp.lt.s32.totalorder %s23, 1
        %s331 = scalar_select %p330, %s23, 1
        %s332 = smul.addr %s331, 8
        %s333 = scalar_lea.vmem %s7, %s332
        %p334 = scmp.lt.s32.totalorder %s23, 1
        %s335 = scalar_select %p334, %s23, 1
        %s336 = smul.addr %s335, 8
        %s337 = scalar_lea.vmem %s7, %s336
        %v339 = vld [vmem:[%s292] sm:$0xff]
        %v340 = vpack.c.bf16 %v339, %v339
        %v341 = vld [vmem:[#allocation4] sm:$0xf]
        %v342 = vld [vmem:[#allocation4 + $0x4] sm:$0xf]
        %v343 = vld [vmem:[%s2] sm:$0x1]
        %v345 = vlaneseq
        %v346 = vshrl.u32 %v345, 7
        %v347 = vsub.s32 0, %v346
        %v348 = vrot.slane %v343, %v347
        %v352 = vunpack.c.l.b16 %v341
        %v353 = vunpack.c.l.b16 %v342
        %v354 = vpack.c.b16 %v353, %v352
        %vm356 = vcmask 130048
        %v358 = vsel %vm356, %v340, 0
        %360 = vmatprep.subr.bf16.mxu0 0
        %361 = vmatpush1.bf16.msra.mxu0 %v354
        %362 = vmatprep.subr.bf16.mxu0 0
        %363 = vmatpush1.bf16.msra.mxu0 0
        %364 = vmatprep.subr.bf16.mxu0 0
        %365 = vmatpush1.bf16.msra.mxu0 0
        %366 = vmatprep.subr.bf16.mxu0 0
        %367 = vmatpush1.bf16.msra.mxu0 0
        %368 = vmatprep.subr.bf16.mxu0 0
        %369 = vmatpush1.bf16.msra.mxu0 0
        %370 = vmatprep.subr.bf16.mxu0 0
        %371 = vmatpush1.bf16.msra.mxu0 0
        %372 = vmatprep.subr.bf16.mxu0 0
        %373 = vmatpush1.bf16.msra.mxu0 0
        %374 = vmatprep.subr.bf16.mxu0 0
        %375 = vmatpush1.bf16.msra.mxu0 0
        %376 = vmatprep.subr.bf16.mxu0 0
        %377 = vmatpush1.bf16.msra.mxu0 0
        %378 = vmatprep.subr.bf16.mxu0 0
        %379 = vmatpush1.bf16.msra.mxu0 0
        %380 = vmatprep.subr.bf16.mxu0 0
        %381 = vmatpush1.bf16.msra.mxu0 0
        %382 = vmatprep.subr.bf16.mxu0 0
        %383 = vmatpush1.bf16.msra.mxu0 0
        %384 = vmatprep.subr.bf16.mxu0 0
        %385 = vmatpush1.bf16.msra.mxu0 0
        %386 = vmatprep.subr.bf16.mxu0 0
        %387 = vmatpush1.bf16.msra.mxu0 0
        %388 = vmatprep.subr.bf16.mxu0 0
        %389 = vmatpush1.bf16.msra.mxu0 0
        %390 = vmatprep.subr.bf16.mxu0 0
        %391 = vmatpush1.bf16.msra.mxu0 0
        %392 = vmatprep.mubr.bf16.mxu0 0
        %393 = vmatmul.mubr.bf16.gmra.mrb[0].mxu0 %v358
        %v394 = vpop.f32.mrb[0].mxu0
        %v395 = vadd.f32 %v348, %v394
        %v396 = vpop.f32.mrb[0].mxu0
        %v397 = vpop.f32.mrb[0].mxu0
        %v398 = vpop.f32.mrb[0].mxu0
        %399 = vdwg.mxu0
        %v400 = vmax.f32 %v395, 0.0
        %v401 = vpack.c.bf16 %v400, %v400
        %v402 = vld [vmem:[#allocation6] sm:$0xf]
        %v403 = vld [vmem:[#allocation6 + $0x4] sm:$0xf]
        %v404 = vld [vmem:[#allocation6 + $0x8] sm:$0xf]
        %v405 = vld [vmem:[#allocation6 + $0xc] sm:$0xf]
        %v406 = vld [vmem:[#allocation6 + $0x10] sm:$0xf]
        %v407 = vld [vmem:[#allocation6 + $0x14] sm:$0xf]
        %v408 = vld [vmem:[#allocation6 + $0x18] sm:$0xf]
        %v409 = vld [vmem:[#allocation6 + $0x1c] sm:$0xf]
        %v410 = vld [vmem:[#allocation6 + $0x20] sm:$0xf]
        %v411 = vld [vmem:[#allocation6 + $0x24] sm:$0xf]
        %v412 = vld [vmem:[#allocation6 + $0x28] sm:$0xf]
        %v413 = vld [vmem:[#allocation6 + $0x2c] sm:$0xf]
        %v414 = vld [vmem:[#allocation6 + $0x30] sm:$0xf]
        %v415 = vld [vmem:[#allocation6 + $0x34] sm:$0xf]
        %v416 = vld [vmem:[#allocation6 + $0x38] sm:$0xf]
        %v417 = vld [vmem:[#allocation6 + $0x3c] sm:$0xf]
        %v418 = vld [vmem:[%s4] sm:$0x1]
        %v420 = vlaneseq
        %v421 = vshrl.u32 %v420, 7
        %v422 = vsub.s32 0, %v421
        %v423 = vrot.slane %v418, %v422
        %v441 = vunpack.c.l.b16 %v402
        %v442 = vunpack.c.l.b16 %v403
        %v443 = vunpack.c.l.b16 %v404
        %v444 = vunpack.c.l.b16 %v405
        %v445 = vunpack.c.l.b16 %v406
        %v446 = vunpack.c.l.b16 %v407
        %v447 = vunpack.c.l.b16 %v408
        %v448 = vunpack.c.l.b16 %v409
        %v449 = vunpack.c.l.b16 %v410
        %v450 = vunpack.c.l.b16 %v411
        %v451 = vunpack.c.l.b16 %v412
        %v452 = vunpack.c.l.b16 %v413
        %v453 = vunpack.c.l.b16 %v414
        %v454 = vunpack.c.l.b16 %v415
        %v455 = vunpack.c.l.b16 %v416
        %v456 = vunpack.c.l.b16 %v417
        %v457 = vpack.c.b16 %v442, %v441
        %v458 = vpack.c.b16 %v444, %v443
        %v459 = vpack.c.b16 %v446, %v445
        %v460 = vpack.c.b16 %v448, %v447
        %v461 = vpack.c.b16 %v450, %v449
        %v462 = vpack.c.b16 %v452, %v451
        %v463 = vpack.c.b16 %v454, %v453
        %v464 = vpack.c.b16 %v456, %v455
        %473 = vmatprep.subr.bf16.mxu0 0
        %474 = vmatpush1.bf16.msra.mxu0 %v457
        %475 = vmatprep.subr.bf16.mxu0 0
        %476 = vmatpush1.bf16.msra.mxu0 %v458
        %477 = vmatprep.subr.bf16.mxu0 0
        %478 = vmatpush1.bf16.msra.mxu0 %v459
        %479 = vmatprep.subr.bf16.mxu0 0
        %480 = vmatpush1.bf16.msra.mxu0 %v460
        %481 = vmatprep.subr.bf16.mxu0 0
        %482 = vmatpush1.bf16.msra.mxu0 %v461
        %483 = vmatprep.subr.bf16.mxu0 0
        %484 = vmatpush1.bf16.msra.mxu0 %v462
        %485 = vmatprep.subr.bf16.mxu0 0
        %486 = vmatpush1.bf16.msra.mxu0 %v463
        %487 = vmatprep.subr.bf16.mxu0 0
        %488 = vmatpush1.bf16.msra.mxu0 %v464
        %489 = vmatprep.subr.bf16.mxu0 0
        %490 = vmatpush1.bf16.msra.mxu0 0
        %491 = vmatprep.subr.bf16.mxu0 0
        %492 = vmatpush1.bf16.msra.mxu0 0
        %493 = vmatprep.subr.bf16.mxu0 0
        %494 = vmatpush1.bf16.msra.mxu0 0
        %495 = vmatprep.subr.bf16.mxu0 0
        %496 = vmatpush1.bf16.msra.mxu0 0
        %497 = vmatprep.subr.bf16.mxu0 0
        %498 = vmatpush1.bf16.msra.mxu0 0
        %499 = vmatprep.subr.bf16.mxu0 0
        %500 = vmatpush1.bf16.msra.mxu0 0
        %501 = vmatprep.subr.bf16.mxu0 0
        %502 = vmatpush1.bf16.msra.mxu0 0
        %503 = vmatprep.subr.bf16.mxu0 0
        %504 = vmatpush1.bf16.msra.mxu0 0
        %505 = vmatprep.mubr.bf16.mxu0 0
        %506 = vmatmul.mubr.bf16.gmra.mrb[0].mxu0 %v401
        %v507 = vpop.f32.mrb[0].mxu0
        %v508 = vadd.f32 %v423, %v507
        %v509 = vpop.f32.mrb[0].mxu0
        %v510 = vpop.f32.mrb[0].mxu0
        %v511 = vpop.f32.mrb[0].mxu0
        %512 = vdwg.mxu0
        %v513 = vmax.f32 %v508, 0.0
        %v514 = vpack.c.bf16 %v513, %v513
        %v515 = vld [vmem:[#allocation7] sm:$0xf]
        %v516 = vld [vmem:[#allocation7 + $0x4] sm:$0xf]
        %v517 = vld [vmem:[#allocation7 + $0x8] sm:$0xf]
        %v518 = vld [vmem:[#allocation7 + $0xc] sm:$0xf]
        %v519 = vld [vmem:[#allocation7 + $0x10] sm:$0xf]
        %v520 = vld [vmem:[#allocation7 + $0x14] sm:$0xf]
        %v521 = vld [vmem:[#allocation7 + $0x18] sm:$0xf]
        %v522 = vld [vmem:[#allocation7 + $0x1c] sm:$0xf]
        %v523 = vld [vmem:[#allocation7 + $0x20] sm:$0xf]
        %v524 = vld [vmem:[#allocation7 + $0x24] sm:$0xf]
        %v525 = vld [vmem:[#allocation7 + $0x28] sm:$0xf]
        %v526 = vld [vmem:[#allocation7 + $0x2c] sm:$0xf]
        %v527 = vld [vmem:[#allocation7 + $0x30] sm:$0xf]
        %v528 = vld [vmem:[#allocation7 + $0x34] sm:$0xf]
        %v529 = vld [vmem:[#allocation7 + $0x38] sm:$0xf]
        %v530 = vld [vmem:[#allocation7 + $0x3c] sm:$0xf]
        %v531 = vld [vmem:[%s6] sm:$0x1]
        %v533 = vlaneseq
        %v534 = vshrl.u32 %v533, 7
        %v535 = vsub.s32 0, %v534
        %v536 = vrot.slane %v531, %v535
        %v554 = vunpack.c.l.b16 %v515
        %v555 = vunpack.c.l.b16 %v516
        %v556 = vunpack.c.l.b16 %v517
        %v557 = vunpack.c.l.b16 %v518
        %v558 = vunpack.c.l.b16 %v519
        %v559 = vunpack.c.l.b16 %v520
        %v560 = vunpack.c.l.b16 %v521
        %v561 = vunpack.c.l.b16 %v522
        %v562 = vunpack.c.l.b16 %v523
        %v563 = vunpack.c.l.b16 %v524
        %v564 = vunpack.c.l.b16 %v525
        %v565 = vunpack.c.l.b16 %v526
        %v566 = vunpack.c.l.b16 %v527
        %v567 = vunpack.c.l.b16 %v528
        %v568 = vunpack.c.l.b16 %v529
        %v569 = vunpack.c.l.b16 %v530
        %v570 = vpack.c.b16 %v555, %v554
        %v571 = vpack.c.b16 %v557, %v556
        %v572 = vpack.c.b16 %v559, %v558
        %v573 = vpack.c.b16 %v561, %v560
        %v574 = vpack.c.b16 %v563, %v562
        %v575 = vpack.c.b16 %v565, %v564
        %v576 = vpack.c.b16 %v567, %v566
        %v577 = vpack.c.b16 %v569, %v568
        %586 = vmatprep.subr.bf16.mxu0 0
        %587 = vmatpush1.bf16.msra.mxu0 %v570
        %588 = vmatprep.subr.bf16.mxu0 0
        %589 = vmatpush1.bf16.msra.mxu0 %v571
        %590 = vmatprep.subr.bf16.mxu0 0
        %591 = vmatpush1.bf16.msra.mxu0 %v572
        %592 = vmatprep.subr.bf16.mxu0 0
        %593 = vmatpush1.bf16.msra.mxu0 %v573
        %594 = vmatprep.subr.bf16.mxu0 0
        %595 = vmatpush1.bf16.msra.mxu0 %v574
        %596 = vmatprep.subr.bf16.mxu0 0
        %597 = vmatpush1.bf16.msra.mxu0 %v575
        %598 = vmatprep.subr.bf16.mxu0 0
        %599 = vmatpush1.bf16.msra.mxu0 %v576
        %600 = vmatprep.subr.bf16.mxu0 0
        %601 = vmatpush1.bf16.msra.mxu0 %v577
        %602 = vmatprep.subr.bf16.mxu0 0
        %603 = vmatpush1.bf16.msra.mxu0 0
        %604 = vmatprep.subr.bf16.mxu0 0
        %605 = vmatpush1.bf16.msra.mxu0 0
        %606 = vmatprep.subr.bf16.mxu0 0
        %607 = vmatpush1.bf16.msra.mxu0 0
        %608 = vmatprep.subr.bf16.mxu0 0
        %609 = vmatpush1.bf16.msra.mxu0 0
        %610 = vmatprep.subr.bf16.mxu0 0
        %611 = vmatpush1.bf16.msra.mxu0 0
        %612 = vmatprep.subr.bf16.mxu0 0
        %613 = vmatpush1.bf16.msra.mxu0 0
        %614 = vmatprep.subr.bf16.mxu0 0
        %615 = vmatpush1.bf16.msra.mxu0 0
        %616 = vmatprep.subr.bf16.mxu0 0
        %617 = vmatpush1.bf16.msra.mxu0 0
        %618 = vmatprep.mubr.bf16.mxu0 0
        %619 = vmatmul.mubr.bf16.gmra.mrb[0].mxu0 %v514
        %v620 = vpop.f32.mrb[0].mxu0
        %v621 = vadd.f32 %v536, %v620
        %v622 = vpop.f32.mrb[0].mxu0
        %v623 = vpop.f32.mrb[0].mxu0
        %v624 = vpop.f32.mrb[0].mxu0
        %625 = vdwg.mxu0
        %vm626 = vcmask 31744
        %627 = vst.msk [vmem:[%s337] sm:$0xff] %vm626, %v621
        %p628 = scmp.lt.s32.totalorder %s23, 1
        %s629 = scalar_select %p628, %s23, 1
        %s630 = smul.addr %s629, 8
        %s631 = scalar_lea.vmem %s7, %s630
        // Predicated region
        $region65: #{tpu_custom_call.1} parent=47 // pred_check
          %p632 = pneg %p193
        $region66: #{tpu_custom_call.1} parent=47 // pred_check_branch
          %634 = sbr.rel (%p632) target = $region68
        $region67: #{tpu_custom_call.1} parent=47 // pred_region
          _
        $region68: #{tpu_custom_call.1} parent=47 // pred_fallthru
          _
      $region48: #{tpu_custom_call.1} parent=5 // pred_fallthru
        _
      %p635 = scmp.le.s32.totalorder 2, %s18
      // Predicated region
      $region69: #{tpu_custom_call.1} parent=5 // pred_check
        %p636 = pneg %p635
      $region70: #{tpu_custom_call.1} parent=5 // pred_check_branch
        %638 = sbr.rel (%p636) target = $region72
      $region71: #{tpu_custom_call.1} parent=5 // pred_region
        %s639 = ssub.s32 %s18, 2
        // Predicated region
        $region73: #{tpu_custom_call.1} parent=71 // pred_check
          %p640 = pneg %p199
        $region74: #{tpu_custom_call.1} parent=71 // pred_check_branch
          %642 = sbr.rel (%p640) target = $region76
        $region75: #{tpu_custom_call.1} parent=71 // pred_region
          %p643 = scmp.lt.s32.totalorder %s24, 1
          %s644 = scalar_select %p643, %s24, 1
          %s645 = smul.addr %s644, 8
          %s646 = scalar_lea.vmem %s7, %s645
        $region76: #{tpu_custom_call.1} parent=71 // pred_fallthru
          _
      $region72: #{tpu_custom_call.1} parent=5 // pred_fallthru
        _
    $region6: #{tpu_custom_call.1} parent=1 // loop_footer
      %s22 = sadd.s32 1, %s18
    $region7: #{tpu_custom_call.1} parent=1 // loop_footer_branch
      %17 = sbr.rel target = $region3
    $region8: #{tpu_custom_call.1} parent=1 // loop_exit
      _
    %647 = vsyncpa [#allocation3], 1
    %s648 = scalar_lea.sflag [#allocation3], 1
    %649 = vsyncpa %s648, 1
    %650 = vsyncpa [#allocation5], 1
    %651 = vsyncpa [#allocation8], 1

</llo_original>
